<compile_context>
chip_gen: v6e
topology: v6e:2x2x1
jax: 0.10.0
libtpu: 0.0.40
codegen_flags: <defaults>
</compile_context>

<pallas_src>
import jax
import jax.numpy as jnp
from jax import lax
from jax.experimental import pallas as pl
from jax.experimental.pallas import tpu as pltpu


def _round_up(x: int, m: int) -> int:
    return (x + m - 1) // m * m


# ---------------------------------------------------------------------------
# PostprocessInit kernel: per-batch token histogram with validity mask.
# token_count[b, v] = #{ s : input_ids[b, s] == v  and  s < last_token_index[b] }
# (masked positions simply don't contribute -- equivalent to the reference's
#  out-of-range sentinel index `vocab_size` being dropped by the scatter)
# ---------------------------------------------------------------------------
def _token_count_kernel(ids_ref, lti_ref, out_ref):
    # ids_ref : VMEM (TB, TS, 1) int32  -- 8 batch rows, TS seq positions in sublanes
    # lti_ref : VMEM (TB, 1, 1)  int32
    # out_ref : VMEM (TB, TV)    int32  -- lane-dense vocab tile, resident over s
    TB, TS, _ = ids_ref.shape
    TV = out_ref.shape[1]
    vi = pl.program_id(1)
    si = pl.program_id(2)

    @pl.when(si == 0)
    def _init():
        out_ref[...] = jnp.zeros_like(out_ref)

    s_base = si * TS
    v_base = vi * TV
    pos = lax.broadcasted_iota(jnp.int32, (1, TS, 1), 1) + s_base    # (1, TS, 1)
    lane = lax.broadcasted_iota(jnp.int32, (1, 1, TV), 2)            # (1, 1, TV)

    valid = pos < lti_ref[...]                                       # (TB, TS, 1)
    # shift ids by the vocab-tile base on the small (TB,TS,1) side; invalid
    # positions get -1 which never matches a lane index in [0, TV).
    ids_eff = jnp.where(valid, ids_ref[...] - v_base, -1)            # (TB, TS, 1)
    hits = (ids_eff == lane).astype(jnp.int32)                       # (TB, TS, TV)
    out_ref[...] += jnp.sum(hits, axis=1)                            # (TB, TV)


def postprocess_init(input_ids: jax.Array, last_token_index: jax.Array,
                     vocab_size: int) -> jax.Array:
    """Pallas equivalent of PostprocessInit.forward."""
    B, S = input_ids.shape
    assert last_token_index.shape[0] == B

    TB = 8                                           # batch rows per block (sublanes)
    TV = min(2048, _round_up(vocab_size, 128))       # lane-dense vocab tile
    TS = min(128, _round_up(S, 8))                   # seq chunk per grid step
    B_pad = _round_up(B, TB)
    V_pad = _round_up(vocab_size, TV)
    S_pad = _round_up(S, TS)

    # Pad ids with -1 (never matches a vocab id) and padded batch rows get lti=0.
    ids = jnp.full((B_pad, S_pad, 1), -1, jnp.int32)
    ids = ids.at[:B, :S, 0].set(input_ids.astype(jnp.int32))

    lti = jnp.zeros((B_pad, 1, 1), jnp.int32)
    lti = lti.at[:B, 0, 0].set(last_token_index.astype(jnp.int32).reshape(B))

    out = pl.pallas_call(
        _token_count_kernel,
        out_shape=jax.ShapeDtypeStruct((B_pad, V_pad), jnp.int32),
        grid_spec=pltpu.PrefetchScalarGridSpec(
            num_scalar_prefetch=0,
            grid=(B_pad // TB, V_pad // TV, S_pad // TS),
            in_specs=[
                pl.BlockSpec((TB, TS, 1), lambda b, v, s: (b, s, 0)),
                pl.BlockSpec((TB, 1, 1), lambda b, v, s: (b, 0, 0)),
            ],
            out_specs=pl.BlockSpec((TB, TV), lambda b, v, s: (b, v)),
        ),
        compiler_params=pltpu.CompilerParams(
            dimension_semantics=("parallel", "parallel", "arbitrary")),
    )(ids, lti)
    return out[:B, :vocab_size]


# ---------------------------------------------------------------------------
# Tiled LM-head matmul (bf16 MXU inputs, f32 accumulation directly in o_ref).
# ---------------------------------------------------------------------------
def _lm_head_kernel(a_ref, b_ref, o_ref):
    @pl.when(pl.program_id(2) == 0)
    def _init():
        o_ref[...] = jnp.zeros_like(o_ref)

    # f32 output block is resident across the K ("arbitrary") axis.
    o_ref[...] += jnp.dot(a_ref[...], b_ref[...],
                          preferred_element_type=jnp.float32)


class LMHead:
    """LM-head weight is prepared (bf16 cast + pad) ONCE, outside the call path."""

    def __init__(self, weight: jax.Array, tm_cap: int = 1024,
                 tn_cap: int = 512, tk_cap: int = 1024):
        K, N = weight.shape
        self.k, self.n = K, N
        self.tm_cap = tm_cap
        self.tn = min(tn_cap, _round_up(N, 128))
        self.tk = min(tk_cap, _round_up(K, 128))
        K_pad = _round_up(K, self.tk)
        N_pad = _round_up(N, self.tn)
        w = weight.astype(jnp.bfloat16)
        if (K_pad, N_pad) != (K, N):
            w = jnp.zeros((K_pad, N_pad), jnp.bfloat16).at[:K, :N].set(w)
        self.w = w   # padded bf16 weight, reused on every call

    def __call__(self, hidden: jax.Array) -> jax.Array:
        M, K = hidden.shape
        assert K == self.k
        K_pad, N_pad = self.w.shape
        tn, tk = self.tn, self.tk
        # tm: multiple of 256 (full bf16 MXU passes), capped for a v7x-safe
        # VMEM budget (a 2MiB + b 1MiB + o 2MiB, double-buffered ~= 10 MiB).
        tm = min(self.tm_cap, _round_up(M, 256))
        M_pad = _round_up(M, tm)

        a = hidden.astype(jnp.bfloat16)
        if (M_pad, K_pad) != (M, K):
            a = jnp.zeros((M_pad, K_pad), jnp.bfloat16).at[:M, :K].set(a)

        gm, gn, gk = M_pad // tm, N_pad // tn, K_pad // tk
        cost = pl.CostEstimate(
            flops=2 * M_pad * N_pad * K_pad,
            transcendentals=0,
            bytes_accessed=(gn * M_pad * K_pad * 2      # A re-read per N tile
                            + gm * K_pad * N_pad * 2    # W re-read per M tile
                            + M_pad * N_pad * 4))       # f32 logits write

        out = pl.pallas_call(
            _lm_head_kernel,
            out_shape=jax.ShapeDtypeStruct((M_pad, N_pad), jnp.float32),
            grid_spec=pltpu.PrefetchScalarGridSpec(
                num_scalar_prefetch=0,
                grid=(gm, gn, gk),
                in_specs=[pl.BlockSpec((tm, tk), lambda i, j, k: (i, k)),
                          pl.BlockSpec((tk, tn), lambda i, j, k: (k, j))],
                out_specs=pl.BlockSpec((tm, tn), lambda i, j, k: (i, j))),
            compiler_params=pltpu.CompilerParams(
                dimension_semantics=("parallel", "parallel", "arbitrary")),
            cost_estimate=cost,
        )(a, self.w)
        return out[:M, :self.n]


# ---------------------------------------------------------------------------
# Tiny synthetic lm_model (the original wraps an arbitrary ModelForCausalLM).
# ---------------------------------------------------------------------------
def lm_model(input_ids: jax.Array, embed: jax.Array, lm_head: LMHead):
    """Returns (logits,) with logits of shape (B, S, V)."""
    B, S = input_ids.shape
    # TODO(synk): embedding gather is plain-JAX glue (the wrapped lm_model is
    # arbitrary in the original module); only the LM head runs in Pallas.
    hidden = jnp.take(embed, input_ids, axis=0).reshape(B * S, embed.shape[1])
    logits = lm_head(hidden).reshape(B, S, lm_head.n)
    return (logits,)


# ---------------------------------------------------------------------------
# ModelWithPostprocessInit
# ---------------------------------------------------------------------------
def model_with_postprocess_init(cache_gen_inputs, embed, lm_head: LMHead,
                                vocab_size: int):
    outputs = lm_model(cache_gen_inputs["input_ids"], embed, lm_head)
    token_count = postprocess_init(cache_gen_inputs["input_ids"],
                                   cache_gen_inputs["last_token_index"],
                                   vocab_size)
    return (*outputs, token_count)


# ---------------------------------------------------------------------------
# Pure-JAX references (correctness checks)
# ---------------------------------------------------------------------------
def token_count_ref(input_ids, last_token_index, vocab_size):
    B, S = input_ids.shape
    pos = jnp.arange(S, dtype=jnp.int32)[None, :]
    valid = pos < last_token_index.astype(jnp.int32).reshape(B, 1)
    onehot = (input_ids.astype(jnp.int32)[:, :, None] ==
              jnp.arange(vocab_size, dtype=jnp.int32)[None, None, :])
    return jnp.sum(onehot & valid[:, :, None], axis=1).astype(jnp.int32)


if __name__ == "__main__":
    B, S, H, V = 2, 8, 32, 32

    key = jax.random.PRNGKey(0)
    k_ids, k_lti, k_emb, k_w = jax.random.split(key, 4)

    input_ids = jax.random.randint(k_ids, (B, S), 0, V, dtype=jnp.int32)
    last_token_index = jax.random.randint(k_lti, (B, 1), 1, S + 1,
                                          dtype=jnp.int32)
    embed = jax.random.normal(k_emb, (V, H), dtype=jnp.float32) * 0.02
    w_head = jax.random.normal(k_w, (H, V), dtype=jnp.float32) * 0.02

    lm_head = LMHead(w_head)          # one-time weight cast + pad (hoisted)
    cache_gen_inputs = {"input_ids": input_ids,
                        "last_token_index": last_token_index}

    logits, token_count = model_with_postprocess_init(
        cache_gen_inputs, embed, lm_head, V)
    jax.block_until_ready((logits, token_count))

    # token_count vs pure-JAX reference (exact int match).
    ref_tc = token_count_ref(input_ids, last_token_index, V)
    assert token_count.shape == (B, V) and token_count.dtype == jnp.int32
    assert jnp.array_equal(token_count, ref_tc), "token_count mismatch"

    # logits vs f32 matmul of the same bf16-rounded operands (matches MXU math);
    # tolerance loosened a bit for chunked-K accumulation order differences.
    hidden = jnp.take(embed, input_ids, axis=0).reshape(B * S, H)
    a32 = hidden.astype(jnp.bfloat16).astype(jnp.float32)
    b32 = w_head.astype(jnp.bfloat16).astype(jnp.float32)
    ref_logits = jnp.dot(a32, b32,
                         precision=jax.lax.Precision.HIGHEST).reshape(B, S, V)
    assert logits.shape == (B, S, V) and logits.dtype == jnp.float32
    assert jnp.allclose(logits, ref_logits, atol=1e-3, rtol=1e-3), "logits mismatch"

    print("KERNEL_OK")
</pallas_src>

<mosaic_0001>
module attributes {stable_mosaic.version = 11 : i64} {
  func.func @_lm_head_kernel(%arg0: i32, %arg1: i32, %arg2: i32, %arg3: memref<256x128xbf16, #tpu.memory_space<vmem>>, %arg4: memref<128x128xbf16, #tpu.memory_space<vmem>>, %arg5: memref<256x128xf32, #tpu.memory_space<vmem>>) attributes {dimension_semantics = [#tpu.dimension_semantics<parallel>, #tpu.dimension_semantics<parallel>, #tpu.dimension_semantics<arbitrary>], iteration_bounds = array<i64: 1, 1, 1>, scalar_prefetch = 0 : i64, scratch_operands = 0 : i64, tpu.core_type = #tpu.core_type<tc>, window_params = [{transform_indices = @transform_0, window_bounds = array<i64: 256, 128>}, {transform_indices = @transform_1, window_bounds = array<i64: 128, 128>}, {transform_indices = @transform_2, window_bounds = array<i64: 256, 128>}]} {
    %c0_i32 = arith.constant 0 : i32
    %0 = arith.cmpi eq, %arg2, %c0_i32 : i32
    %1 = arith.extui %0 : i1 to i32
    %c0_i32_0 = arith.constant 0 : i32
    %2 = arith.cmpi ne, %1, %c0_i32_0 : i32
    scf.if %2 {
      %cst_8 = arith.constant 0.000000e+00 : f32
      %9 = vector.broadcast %cst_8 : f32 to vector<256x128xf32>
      %c0_9 = arith.constant 0 : index
      %c0_10 = arith.constant 0 : index
      %10 = vector.load %arg5[%c0_9, %c0_10] : memref<256x128xf32, #tpu.memory_space<vmem>>, vector<256x128xf32>
      tpu.vector_store %arg5[%c0_9, %c0_10], %9 {strides = array<i32>} : memref<256x128xf32, #tpu.memory_space<vmem>>, vector<256x128xf32>,
    } else {
    }
    %c0 = arith.constant 0 : index
    %c0_1 = arith.constant 0 : index
    %3 = vector.load %arg5[%c0, %c0_1] : memref<256x128xf32, #tpu.memory_space<vmem>>, vector<256x128xf32>
    %c0_2 = arith.constant 0 : index
    %c0_3 = arith.constant 0 : index
    %4 = vector.load %arg3[%c0_2, %c0_3] : memref<256x128xbf16, #tpu.memory_space<vmem>>, vector<256x128xbf16>
    %c0_4 = arith.constant 0 : index
    %c0_5 = arith.constant 0 : index
    %5 = vector.load %arg4[%c0_4, %c0_5] : memref<128x128xbf16, #tpu.memory_space<vmem>>, vector<128x128xbf16>
    %cst = arith.constant dense<0.000000e+00> : vector<256x128xf32>
    %6 = tpu.matmul %4, %5, %cst {dimension_numbers = #tpu.dot_dimension_numbers<[1], [0], [0], [1], [0, 0, 1, 1], [], []>} : vector<256x128xbf16>, vector<128x128xbf16>, vector<256x128xf32> -> vector<256x128xf32>
    %7 = arith.addf %3, %6 : vector<256x128xf32>
    %c0_6 = arith.constant 0 : index
    %c0_7 = arith.constant 0 : index
    %8 = vector.load %arg5[%c0_6, %c0_7] : memref<256x128xf32, #tpu.memory_space<vmem>>, vector<256x128xf32>
    tpu.vector_store %arg5[%c0_6, %c0_7], %7 {strides = array<i32>} : memref<256x128xf32, #tpu.memory_space<vmem>>, vector<256x128xf32>,
    return
  }
  func.func @transform_0(%arg0: i32, %arg1: i32, %arg2: i32) -> (i32, i32) {
    %c0_i32 = arith.constant 0 : i32
    return %arg0, %arg2 : i32, i32
  }
  func.func @transform_1(%arg0: i32, %arg1: i32, %arg2: i32) -> (i32, i32) {
    %c0_i32 = arith.constant 0 : i32
    return %arg2, %arg1 : i32, i32
  }
  func.func @transform_2(%arg0: i32, %arg1: i32, %arg2: i32) -> (i32, i32) {
    %c0_i32 = arith.constant 0 : i32
    return %arg0, %arg1 : i32, i32
  }
}

</mosaic_0001>

<llo_original>
// kernel: tpu_custom_call.1
$region0: #{tpu_custom_call.1}
  #allocation0 [shape = 'u32[]', space=smem, size = 0x4, offset = 0x4, fixed_abs, tag = 'smem constant byte address 0x4 - core index']
  #allocation1 [shape = 'u32[144,128]{1,0:T(1,128)}', space=vmem, size = 0x12000, scoped, tag = 'internal scratch']
  %s0 = inlined_call_operand.hbm [shape: bf16[256,128], index: 0, kind: input, shape index: {}]
  %s1 = inlined_call_operand.hbm [shape: bf16[128,128], index: 1, kind: input, shape index: {}]
  %s2 = inlined_call_operand.hbm [shape: f32[256,128], index: 2, kind: output, shape index: {}]
  %s3 = sld [smem:[#allocation0]]
  $region30: #{tpu_custom_call.1} parent=0
    _
  %s5 = ssub.s32 1, %s3
  %s6 = scalar_select 0, %s5, %s3
  $region1: #{tpu_custom_call.1} parent=0
    #allocation2 [shape = 'u8[65536]{0}', space=vmem, size = 0x10000, scoped, tag = 'input window, operand 0, single buffered']
    #allocation3 [shape = 's32[1]{0}', space=sflag, size = 0x4, scoped, tag = 'scoped memory for tpu_custom_call.1']
    #allocation4 [shape = 's32[1]{0}', space=sflag, size = 0x4, scoped, tag = 'scoped memory for tpu_custom_call.1']
    #allocation5 [shape = 'u8[32768]{0}', space=vmem, size = 0x8000, scoped, tag = 'input window, operand 1, single buffered']
    #allocation6 [shape = 's32[1]{0}', space=sflag, size = 0x4, scoped, tag = 'scoped memory for tpu_custom_call.1']
    #allocation7 [shape = 'u8[131072]{0}', space=vmem, size = 0x20000, scoped, tag = 'output window, operand 0, single buffered']
    %7 = vsyncpa [#allocation3], 0
    %8 = vsyncpa [#allocation6], 0
    %9 = vsyncpa [#allocation4], 0
    // Predicated region
    $region2: #{tpu_custom_call.1} parent=1 // pred_check
      _
    $region3: #{tpu_custom_call.1} parent=1 // pred_check_branch
      %11 = sbr.rel (0) target = $region5
    $region4: #{tpu_custom_call.1} parent=1 // pred_region
      %s13 = ssub.s32 2048, 2048
      %14 = vsyncadd [#allocation3], %s13
      %s15 = sshll.u32 [#allocation2], 4
      %s16 = int_to_ptr.vmem [resolvable:$true] %s15
      %21 = dma.hbm_to_vmem [thread:$0]  %s0, 2048, %s16, [#allocation3], 64, 64, 4
    $region5: #{tpu_custom_call.1} parent=1 // pred_fallthru
      _
    // Predicated region
    $region6: #{tpu_custom_call.1} parent=1 // pred_check
      _
    $region7: #{tpu_custom_call.1} parent=1 // pred_check_branch
      %23 = sbr.rel (0) target = $region9
    $region8: #{tpu_custom_call.1} parent=1 // pred_region
      %s25 = ssub.s32 1024, 1024
      %26 = vsyncadd [#allocation6], %s25
      %s27 = sshll.u32 [#allocation5], 4
      %s28 = int_to_ptr.vmem [resolvable:$true] %s27
      %33 = dma.hbm_to_vmem [thread:$0]  %s1, 1024, %s28, [#allocation6], 64, 64, 4
    $region9: #{tpu_custom_call.1} parent=1 // pred_fallthru
      _
    // Predicated region
    $region10: #{tpu_custom_call.1} parent=1 // pred_check
      _
    $region11: #{tpu_custom_call.1} parent=1 // pred_check_branch
      %35 = sbr.rel (0) target = $region13
    $region12: #{tpu_custom_call.1} parent=1 // pred_region
      %36 = dma.done [#allocation3], 2048
    $region13: #{tpu_custom_call.1} parent=1 // pred_fallthru
      _
    // Predicated region
    $region14: #{tpu_custom_call.1} parent=1 // pred_check
      _
    $region15: #{tpu_custom_call.1} parent=1 // pred_check_branch
      %38 = sbr.rel (0) target = $region17
    $region16: #{tpu_custom_call.1} parent=1 // pred_region
      %39 = dma.done [#allocation6], 1024
    $region17: #{tpu_custom_call.1} parent=1 // pred_fallthru
      _
    %p41 = scmp.eq.s32.totalorder 0, 0
    // Predicated region
    $region18: #{tpu_custom_call.1} parent=1 // pred_check
      %p42 = pneg %p41
    $region19: #{tpu_custom_call.1} parent=1 // pred_check_branch
      %44 = sbr.rel (%p42) target = $region21
    $region20: #{tpu_custom_call.1} parent=1 // pred_region
      %45 = vst [vmem:[#allocation7] sm:$0xff] 0.0
      %46 = vst [vmem:[#allocation7 + $0x8] sm:$0xff] 0.0
      %47 = vst [vmem:[#allocation7 + $0x10] sm:$0xff] 0.0
      %48 = vst [vmem:[#allocation7 + $0x18] sm:$0xff] 0.0
      %49 = vst [vmem:[#allocation7 + $0x20] sm:$0xff] 0.0
      %50 = vst [vmem:[#allocation7 + $0x28] sm:$0xff] 0.0
      %51 = vst [vmem:[#allocation7 + $0x30] sm:$0xff] 0.0
      %52 = vst [vmem:[#allocation7 + $0x38] sm:$0xff] 0.0
      %53 = vst [vmem:[#allocation7 + $0x40] sm:$0xff] 0.0
      %54 = vst [vmem:[#allocation7 + $0x48] sm:$0xff] 0.0
      %55 = vst [vmem:[#allocation7 + $0x50] sm:$0xff] 0.0
      %56 = vst [vmem:[#allocation7 + $0x58] sm:$0xff] 0.0
      %57 = vst [vmem:[#allocation7 + $0x60] sm:$0xff] 0.0
      %58 = vst [vmem:[#allocation7 + $0x68] sm:$0xff] 0.0
      %59 = vst [vmem:[#allocation7 + $0x70] sm:$0xff] 0.0
      %60 = vst [vmem:[#allocation7 + $0x78] sm:$0xff] 0.0
      %61 = vst [vmem:[#allocation7 + $0x80] sm:$0xff] 0.0
      %62 = vst [vmem:[#allocation7 + $0x88] sm:$0xff] 0.0
      %63 = vst [vmem:[#allocation7 + $0x90] sm:$0xff] 0.0
      %64 = vst [vmem:[#allocation7 + $0x98] sm:$0xff] 0.0
      %65 = vst [vmem:[#allocation7 + $0xa0] sm:$0xff] 0.0
      %66 = vst [vmem:[#allocation7 + $0xa8] sm:$0xff] 0.0
      %67 = vst [vmem:[#allocation7 + $0xb0] sm:$0xff] 0.0
      %68 = vst [vmem:[#allocation7 + $0xb8] sm:$0xff] 0.0
      %69 = vst [vmem:[#allocation7 + $0xc0] sm:$0xff] 0.0
      %70 = vst [vmem:[#allocation7 + $0xc8] sm:$0xff] 0.0
      %71 = vst [vmem:[#allocation7 + $0xd0] sm:$0xff] 0.0
      %72 = vst [vmem:[#allocation7 + $0xd8] sm:$0xff] 0.0
      %73 = vst [vmem:[#allocation7 + $0xe0] sm:$0xff] 0.0
      %74 = vst [vmem:[#allocation7 + $0xe8] sm:$0xff] 0.0
      %75 = vst [vmem:[#allocation7 + $0xf0] sm:$0xff] 0.0
      %76 = vst [vmem:[#allocation7 + $0xf8] sm:$0xff] 0.0
    $region21: #{tpu_custom_call.1} parent=1 // pred_fallthru
      _
    %v77 = vld [vmem:[#allocation7] sm:$0xff]
    %v78 = vld [vmem:[#allocation7 + $0x8] sm:$0xff]
    %v79 = vld [vmem:[#allocation7 + $0x10] sm:$0xff]
    %v80 = vld [vmem:[#allocation7 + $0x18] sm:$0xff]
    %v81 = vld [vmem:[#allocation7 + $0x20] sm:$0xff]
    %v82 = vld [vmem:[#allocation7 + $0x28] sm:$0xff]
    %v83 = vld [vmem:[#allocation7 + $0x30] sm:$0xff]
    %v84 = vld [vmem:[#allocation7 + $0x38] sm:$0xff]
    %v85 = vld [vmem:[#allocation7 + $0x40] sm:$0xff]
    %v86 = vld [vmem:[#allocation7 + $0x48] sm:$0xff]
    %v87 = vld [vmem:[#allocation7 + $0x50] sm:$0xff]
    %v88 = vld [vmem:[#allocation7 + $0x58] sm:$0xff]
    %v89 = vld [vmem:[#allocation7 + $0x60] sm:$0xff]
    %v90 = vld [vmem:[#allocation7 + $0x68] sm:$0xff]
    %v91 = vld [vmem:[#allocation7 + $0x70] sm:$0xff]
    %v92 = vld [vmem:[#allocation7 + $0x78] sm:$0xff]
    %v93 = vld [vmem:[#allocation7 + $0x80] sm:$0xff]
    %v94 = vld [vmem:[#allocation7 + $0x88] sm:$0xff]
    %v95 = vld [vmem:[#allocation7 + $0x90] sm:$0xff]
    %v96 = vld [vmem:[#allocation7 + $0x98] sm:$0xff]
    %v97 = vld [vmem:[#allocation7 + $0xa0] sm:$0xff]
    %v98 = vld [vmem:[#allocation7 + $0xa8] sm:$0xff]
    %v99 = vld [vmem:[#allocation7 + $0xb0] sm:$0xff]
    %v100 = vld [vmem:[#allocation7 + $0xb8] sm:$0xff]
    %v101 = vld [vmem:[#allocation7 + $0xc0] sm:$0xff]
    %v102 = vld [vmem:[#allocation7 + $0xc8] sm:$0xff]
    %v103 = vld [vmem:[#allocation7 + $0xd0] sm:$0xff]
    %v104 = vld [vmem:[#allocation7 + $0xd8] sm:$0xff]
    %v105 = vld [vmem:[#allocation7 + $0xe0] sm:$0xff]
    %v106 = vld [vmem:[#allocation7 + $0xe8] sm:$0xff]
    %v107 = vld [vmem:[#allocation7 + $0xf0] sm:$0xff]
    %v108 = vld [vmem:[#allocation7 + $0xf8] sm:$0xff]
    %v109 = vld [vmem:[#allocation2] sm:$0xf]
    %v110 = vld [vmem:[#allocation2 + $0x4] sm:$0xf]
    %v111 = vld [vmem:[#allocation2 + $0x8] sm:$0xf]
    %v112 = vld [vmem:[#allocation2 + $0xc] sm:$0xf]
    %v113 = vld [vmem:[#allocation2 + $0x10] sm:$0xf]
    %v114 = vld [vmem:[#allocation2 + $0x14] sm:$0xf]
    %v115 = vld [vmem:[#allocation2 + $0x18] sm:$0xf]
    %v116 = vld [vmem:[#allocation2 + $0x1c] sm:$0xf]
    %v117 = vld [vmem:[#allocation2 + $0x20] sm:$0xf]
    %v118 = vld [vmem:[#allocation2 + $0x24] sm:$0xf]
    %v119 = vld [vmem:[#allocation2 + $0x28] sm:$0xf]
    %v120 = vld [vmem:[#allocation2 + $0x2c] sm:$0xf]
    %v121 = vld [vmem:[#allocation2 + $0x30] sm:$0xf]
    %v122 = vld [vmem:[#allocation2 + $0x34] sm:$0xf]
    %v123 = vld [vmem:[#allocation2 + $0x38] sm:$0xf]
    %v124 = vld [vmem:[#allocation2 + $0x3c] sm:$0xf]
    %v125 = vld [vmem:[#allocation2 + $0x40] sm:$0xf]
    %v126 = vld [vmem:[#allocation2 + $0x44] sm:$0xf]
    %v127 = vld [vmem:[#allocation2 + $0x48] sm:$0xf]
    %v128 = vld [vmem:[#allocation2 + $0x4c] sm:$0xf]
    %v129 = vld [vmem:[#allocation2 + $0x50] sm:$0xf]
    %v130 = vld [vmem:[#allocation2 + $0x54] sm:$0xf]
    %v131 = vld [vmem:[#allocation2 + $0x58] sm:$0xf]
    %v132 = vld [vmem:[#allocation2 + $0x5c] sm:$0xf]
    %v133 = vld [vmem:[#allocation2 + $0x60] sm:$0xf]
    %v134 = vld [vmem:[#allocation2 + $0x64] sm:$0xf]
    %v135 = vld [vmem:[#allocation2 + $0x68] sm:$0xf]
    %v136 = vld [vmem:[#allocation2 + $0x6c] sm:$0xf]
    %v137 = vld [vmem:[#allocation2 + $0x70] sm:$0xf]
    %v138 = vld [vmem:[#allocation2 + $0x74] sm:$0xf]
    %v139 = vld [vmem:[#allocation2 + $0x78] sm:$0xf]
    %v140 = vld [vmem:[#allocation2 + $0x7c] sm:$0xf]
    %v141 = vld [vmem:[#allocation5] sm:$0xf]
    %v142 = vld [vmem:[#allocation5 + $0x4] sm:$0xf]
    %v143 = vld [vmem:[#allocation5 + $0x8] sm:$0xf]
    %v144 = vld [vmem:[#allocation5 + $0xc] sm:$0xf]
    %v145 = vld [vmem:[#allocation5 + $0x10] sm:$0xf]
    %v146 = vld [vmem:[#allocation5 + $0x14] sm:$0xf]
    %v147 = vld [vmem:[#allocation5 + $0x18] sm:$0xf]
    %v148 = vld [vmem:[#allocation5 + $0x1c] sm:$0xf]
    %v149 = vld [vmem:[#allocation5 + $0x20] sm:$0xf]
    %v150 = vld [vmem:[#allocation5 + $0x24] sm:$0xf]
    %v151 = vld [vmem:[#allocation5 + $0x28] sm:$0xf]
    %v152 = vld [vmem:[#allocation5 + $0x2c] sm:$0xf]
    %v153 = vld [vmem:[#allocation5 + $0x30] sm:$0xf]
    %v154 = vld [vmem:[#allocation5 + $0x34] sm:$0xf]
    %v155 = vld [vmem:[#allocation5 + $0x38] sm:$0xf]
    %v156 = vld [vmem:[#allocation5 + $0x3c] sm:$0xf]
    %v189 = vunpack.c.l.b16 %v109
    %v190 = vunpack.c.l.b16 %v110
    %v191 = vunpack.c.l.b16 %v111
    %v192 = vunpack.c.l.b16 %v112
    %v193 = vunpack.c.l.b16 %v113
    %v194 = vunpack.c.l.b16 %v114
    %v195 = vunpack.c.l.b16 %v115
    %v196 = vunpack.c.l.b16 %v116
    %v197 = vunpack.c.l.b16 %v117
    %v198 = vunpack.c.l.b16 %v118
    %v199 = vunpack.c.l.b16 %v119
    %v200 = vunpack.c.l.b16 %v120
    %v201 = vunpack.c.l.b16 %v121
    %v202 = vunpack.c.l.b16 %v122
    %v203 = vunpack.c.l.b16 %v123
    %v204 = vunpack.c.l.b16 %v124
    %v205 = vunpack.c.l.b16 %v125
    %v206 = vunpack.c.l.b16 %v126
    %v207 = vunpack.c.l.b16 %v127
    %v208 = vunpack.c.l.b16 %v128
    %v209 = vunpack.c.l.b16 %v129
    %v210 = vunpack.c.l.b16 %v130
    %v211 = vunpack.c.l.b16 %v131
    %v212 = vunpack.c.l.b16 %v132
    %v213 = vunpack.c.l.b16 %v133
    %v214 = vunpack.c.l.b16 %v134
    %v215 = vunpack.c.l.b16 %v135
    %v216 = vunpack.c.l.b16 %v136
    %v217 = vunpack.c.l.b16 %v137
    %v218 = vunpack.c.l.b16 %v138
    %v219 = vunpack.c.l.b16 %v139
    %v220 = vunpack.c.l.b16 %v140
    %v221 = vpack.c.b16 %v190, %v189
    %v222 = vpack.c.b16 %v192, %v191
    %v223 = vpack.c.b16 %v194, %v193
    %v224 = vpack.c.b16 %v196, %v195
    %v225 = vpack.c.b16 %v198, %v197
    %v226 = vpack.c.b16 %v200, %v199
    %v227 = vpack.c.b16 %v202, %v201
    %v228 = vpack.c.b16 %v204, %v203
    %v229 = vpack.c.b16 %v206, %v205
    %v230 = vpack.c.b16 %v208, %v207
    %v231 = vpack.c.b16 %v210, %v209
    %v232 = vpack.c.b16 %v212, %v211
    %v233 = vpack.c.b16 %v214, %v213
    %v234 = vpack.c.b16 %v216, %v215
    %v235 = vpack.c.b16 %v218, %v217
    %v236 = vpack.c.b16 %v220, %v219
    %v269 = vunpack.c.l.b16 %v141
    %v270 = vunpack.c.l.b16 %v142
    %v271 = vunpack.c.l.b16 %v143
    %v272 = vunpack.c.l.b16 %v144
    %v273 = vunpack.c.l.b16 %v145
    %v274 = vunpack.c.l.b16 %v146
    %v275 = vunpack.c.l.b16 %v147
    %v276 = vunpack.c.l.b16 %v148
    %v277 = vunpack.c.l.b16 %v149
    %v278 = vunpack.c.l.b16 %v150
    %v279 = vunpack.c.l.b16 %v151
    %v280 = vunpack.c.l.b16 %v152
    %v281 = vunpack.c.l.b16 %v153
    %v282 = vunpack.c.l.b16 %v154
    %v283 = vunpack.c.l.b16 %v155
    %v284 = vunpack.c.l.b16 %v156
    %v285 = vpack.c.b16 %v270, %v269
    %v286 = vpack.c.b16 %v272, %v271
    %v287 = vpack.c.b16 %v274, %v273
    %v288 = vpack.c.b16 %v276, %v275
    %v289 = vpack.c.b16 %v278, %v277
    %v290 = vpack.c.b16 %v280, %v279
    %v291 = vpack.c.b16 %v282, %v281
    %v292 = vpack.c.b16 %v284, %v283
    %301 = vmatprep.subr.bf16.mxu0 0
    %302 = vmatpush1.bf16.msra.mxu0 %v292
    %303 = vmatprep.subr.bf16.mxu0 0
    %304 = vmatpush1.bf16.msra.mxu0 %v291
    %305 = vmatprep.subr.bf16.mxu0 0
    %306 = vmatpush1.bf16.msra.mxu0 %v290
    %307 = vmatprep.subr.bf16.mxu0 0
    %308 = vmatpush1.bf16.msra.mxu0 %v289
    %309 = vmatprep.subr.bf16.mxu0 0
    %310 = vmatpush1.bf16.msra.mxu0 %v288
    %311 = vmatprep.subr.bf16.mxu0 0
    %312 = vmatpush1.bf16.msra.mxu0 %v287
    %313 = vmatprep.subr.bf16.mxu0 0
    %314 = vmatpush1.bf16.msra.mxu0 %v286
    %315 = vmatprep.subr.bf16.mxu0 0
    %316 = vmatpush1.bf16.msra.mxu0 %v285
    %317 = vmatprep.subr.bf16.mxu0 0
    %318 = vmatpush2.bf16.msra.mxu0 0
    %319 = vmatprep.subr.bf16.mxu0 0
    %320 = vmatpush2.bf16.msra.mxu0 0
    %321 = vmatprep.subr.bf16.mxu0 0
    %322 = vmatpush2.bf16.msra.mxu0 0
    %323 = vmatprep.subr.bf16.mxu0 0
    %324 = vmatpush2.bf16.msra.mxu0 0
    %325 = vmatprep.subr.bf16.mxu0 0
    %326 = vmatpush2.bf16.msra.mxu0 0
    %327 = vmatprep.subr.bf16.mxu0 0
    %328 = vmatpush2.bf16.msra.mxu0 0
    %329 = vmatprep.subr.bf16.mxu0 0
    %330 = vmatpush2.bf16.msra.mxu0 0
    %331 = vmatprep.subr.bf16.mxu0 0
    %332 = vmatpush2.bf16.msra.mxu0 0
    %333 = vmatprep.mubr.bf16.mxu0 0
    %334 = vmatmul.mubr.bf16.gmra.mxu0 %v221
    %v335 = vpop.f32.mrf.mxu0
    %v336 = vadd.f32 0.0, %v335
    %v337 = vpop.f32.mrf.mxu0
    %v338 = vpop.f32.mrf.mxu0
    %v339 = vadd.f32 0.0, %v338
    %v340 = vpop.f32.mrf.mxu0
    %341 = vmatprep.mubr.bf16.mxu0 0
    %342 = vmatmul.mubr.bf16.gmra.mxu0 %v222
    %v343 = vpop.f32.mrf.mxu0
    %v344 = vadd.f32 0.0, %v343
    %v345 = vpop.f32.mrf.mxu0
    %v346 = vpop.f32.mrf.mxu0
    %v347 = vadd.f32 0.0, %v346
    %v348 = vpop.f32.mrf.mxu0
    %349 = vmatprep.mubr.bf16.mxu0 0
    %350 = vmatmul.mubr.bf16.gmra.mxu0 %v223
    %v351 = vpop.f32.mrf.mxu0
    %v352 = vadd.f32 0.0, %v351
    %v353 = vpop.f32.mrf.mxu0
    %v354 = vpop.f32.mrf.mxu0
    %v355 = vadd.f32 0.0, %v354
    %v356 = vpop.f32.mrf.mxu0
    %357 = vmatprep.mubr.bf16.mxu0 0
    %358 = vmatmul.mubr.bf16.gmra.mxu0 %v224
    %v359 = vpop.f32.mrf.mxu0
    %v360 = vadd.f32 0.0, %v359
    %v361 = vpop.f32.mrf.mxu0
    %v362 = vpop.f32.mrf.mxu0
    %v363 = vadd.f32 0.0, %v362
    %v364 = vpop.f32.mrf.mxu0
    %365 = vmatprep.mubr.bf16.mxu0 0
    %366 = vmatmul.mubr.bf16.gmra.mxu0 %v225
    %v367 = vpop.f32.mrf.mxu0
    %v368 = vadd.f32 0.0, %v367
    %v369 = vpop.f32.mrf.mxu0
    %v370 = vpop.f32.mrf.mxu0
    %v371 = vadd.f32 0.0, %v370
    %v372 = vpop.f32.mrf.mxu0
    %373 = vmatprep.mubr.bf16.mxu0 0
    %374 = vmatmul.mubr.bf16.gmra.mxu0 %v226
    %v375 = vpop.f32.mrf.mxu0
    %v376 = vadd.f32 0.0, %v375
    %v377 = vpop.f32.mrf.mxu0
    %v378 = vpop.f32.mrf.mxu0
    %v379 = vadd.f32 0.0, %v378
    %v380 = vpop.f32.mrf.mxu0
    %381 = vmatprep.mubr.bf16.mxu0 0
    %382 = vmatmul.mubr.bf16.gmra.mxu0 %v227
    %v383 = vpop.f32.mrf.mxu0
    %v384 = vadd.f32 0.0, %v383
    %v385 = vpop.f32.mrf.mxu0
    %v386 = vpop.f32.mrf.mxu0
    %v387 = vadd.f32 0.0, %v386
    %v388 = vpop.f32.mrf.mxu0
    %389 = vmatprep.mubr.bf16.mxu0 0
    %390 = vmatmul.mubr.bf16.gmra.mxu0 %v228
    %v391 = vpop.f32.mrf.mxu0
    %v392 = vadd.f32 0.0, %v391
    %v393 = vpop.f32.mrf.mxu0
    %v394 = vpop.f32.mrf.mxu0
    %v395 = vadd.f32 0.0, %v394
    %v396 = vpop.f32.mrf.mxu0
    %397 = vmatprep.mubr.bf16.mxu0 0
    %398 = vmatmul.mubr.bf16.gmra.mxu0 %v229
    %v399 = vpop.f32.mrf.mxu0
    %v400 = vadd.f32 0.0, %v399
    %v401 = vpop.f32.mrf.mxu0
    %v402 = vpop.f32.mrf.mxu0
    %v403 = vadd.f32 0.0, %v402
    %v404 = vpop.f32.mrf.mxu0
    %405 = vmatprep.mubr.bf16.mxu0 0
    %406 = vmatmul.mubr.bf16.gmra.mxu0 %v230
    %v407 = vpop.f32.mrf.mxu0
    %v408 = vadd.f32 0.0, %v407
    %v409 = vpop.f32.mrf.mxu0
    %v410 = vpop.f32.mrf.mxu0
    %v411 = vadd.f32 0.0, %v410
    %v412 = vpop.f32.mrf.mxu0
    %413 = vmatprep.mubr.bf16.mxu0 0
    %414 = vmatmul.mubr.bf16.gmra.mxu0 %v231
    %v415 = vpop.f32.mrf.mxu0
    %v416 = vadd.f32 0.0, %v415
    %v417 = vpop.f32.mrf.mxu0
    %v418 = vpop.f32.mrf.mxu0
    %v419 = vadd.f32 0.0, %v418
    %v420 = vpop.f32.mrf.mxu0
    %421 = vmatprep.mubr.bf16.mxu0 0
    %422 = vmatmul.mubr.bf16.gmra.mxu0 %v232
    %v423 = vpop.f32.mrf.mxu0
    %v424 = vadd.f32 0.0, %v423
    %v425 = vpop.f32.mrf.mxu0
    %v426 = vpop.f32.mrf.mxu0
    %v427 = vadd.f32 0.0, %v426
    %v428 = vpop.f32.mrf.mxu0
    %429 = vmatprep.mubr.bf16.mxu0 0
    %430 = vmatmul.mubr.bf16.gmra.mxu0 %v233
    %v431 = vpop.f32.mrf.mxu0
    %v432 = vadd.f32 0.0, %v431
    %v433 = vpop.f32.mrf.mxu0
    %v434 = vpop.f32.mrf.mxu0
    %v435 = vadd.f32 0.0, %v434
    %v436 = vpop.f32.mrf.mxu0
    %437 = vmatprep.mubr.bf16.mxu0 0
    %438 = vmatmul.mubr.bf16.gmra.mxu0 %v234
    %v439 = vpop.f32.mrf.mxu0
    %v440 = vadd.f32 0.0, %v439
    %v441 = vpop.f32.mrf.mxu0
    %v442 = vpop.f32.mrf.mxu0
    %v443 = vadd.f32 0.0, %v442
    %v444 = vpop.f32.mrf.mxu0
    %445 = vmatprep.mubr.bf16.mxu0 0
    %446 = vmatmul.mubr.bf16.gmra.mxu0 %v235
    %v447 = vpop.f32.mrf.mxu0
    %v448 = vadd.f32 0.0, %v447
    %v449 = vpop.f32.mrf.mxu0
    %v450 = vpop.f32.mrf.mxu0
    %v451 = vadd.f32 0.0, %v450
    %v452 = vpop.f32.mrf.mxu0
    %453 = vmatprep.mubr.bf16.mxu0 0
    %454 = vmatmul.mubr.bf16.gmra.mxu0 %v236
    %v455 = vpop.f32.mrf.mxu0
    %v456 = vadd.f32 0.0, %v455
    %v457 = vpop.f32.mrf.mxu0
    %v458 = vpop.f32.mrf.mxu0
    %v459 = vadd.f32 0.0, %v458
    %v460 = vpop.f32.mrf.mxu0
    %461 = vdwg.mxu0
    %v462 = vadd.f32 %v77, %v336
    %v463 = vadd.f32 %v78, %v339
    %v464 = vadd.f32 %v79, %v344
    %v465 = vadd.f32 %v80, %v347
    %v466 = vadd.f32 %v81, %v352
    %v467 = vadd.f32 %v82, %v355
    %v468 = vadd.f32 %v83, %v360
    %v469 = vadd.f32 %v84, %v363
    %v470 = vadd.f32 %v85, %v368
    %v471 = vadd.f32 %v86, %v371
    %v472 = vadd.f32 %v87, %v376
    %v473 = vadd.f32 %v88, %v379
    %v474 = vadd.f32 %v89, %v384
    %v475 = vadd.f32 %v90, %v387
    %v476 = vadd.f32 %v91, %v392
    %v477 = vadd.f32 %v92, %v395
    %v478 = vadd.f32 %v93, %v400
    %v479 = vadd.f32 %v94, %v403
    %v480 = vadd.f32 %v95, %v408
    %v481 = vadd.f32 %v96, %v411
    %v482 = vadd.f32 %v97, %v416
    %v483 = vadd.f32 %v98, %v419
    %v484 = vadd.f32 %v99, %v424
    %v485 = vadd.f32 %v100, %v427
    %v486 = vadd.f32 %v101, %v432
    %v487 = vadd.f32 %v102, %v435
    %v488 = vadd.f32 %v103, %v440
    %v489 = vadd.f32 %v104, %v443
    %v490 = vadd.f32 %v105, %v448
    %v491 = vadd.f32 %v106, %v451
    %v492 = vadd.f32 %v107, %v456
    %v493 = vadd.f32 %v108, %v459
    %494 = vst [vmem:[#allocation7] sm:$0xff] %v462
    %495 = vst [vmem:[#allocation7 + $0x8] sm:$0xff] %v463
    %496 = vst [vmem:[#allocation7 + $0x10] sm:$0xff] %v464
    %497 = vst [vmem:[#allocation7 + $0x18] sm:$0xff] %v465
    %498 = vst [vmem:[#allocation7 + $0x20] sm:$0xff] %v466
    %499 = vst [vmem:[#allocation7 + $0x28] sm:$0xff] %v467
    %500 = vst [vmem:[#allocation7 + $0x30] sm:$0xff] %v468
    %501 = vst [vmem:[#allocation7 + $0x38] sm:$0xff] %v469
    %502 = vst [vmem:[#allocation7 + $0x40] sm:$0xff] %v470
    %503 = vst [vmem:[#allocation7 + $0x48] sm:$0xff] %v471
    %504 = vst [vmem:[#allocation7 + $0x50] sm:$0xff] %v472
    %505 = vst [vmem:[#allocation7 + $0x58] sm:$0xff] %v473
    %506 = vst [vmem:[#allocation7 + $0x60] sm:$0xff] %v474
    %507 = vst [vmem:[#allocation7 + $0x68] sm:$0xff] %v475
    %508 = vst [vmem:[#allocation7 + $0x70] sm:$0xff] %v476
    %509 = vst [vmem:[#allocation7 + $0x78] sm:$0xff] %v477
    %510 = vst [vmem:[#allocation7 + $0x80] sm:$0xff] %v478
    %511 = vst [vmem:[#allocation7 + $0x88] sm:$0xff] %v479
    %512 = vst [vmem:[#allocation7 + $0x90] sm:$0xff] %v480
    %513 = vst [vmem:[#allocation7 + $0x98] sm:$0xff] %v481
    %514 = vst [vmem:[#allocation7 + $0xa0] sm:$0xff] %v482
    %515 = vst [vmem:[#allocation7 + $0xa8] sm:$0xff] %v483
    %516 = vst [vmem:[#allocation7 + $0xb0] sm:$0xff] %v484
    %517 = vst [vmem:[#allocation7 + $0xb8] sm:$0xff] %v485
    %518 = vst [vmem:[#allocation7 + $0xc0] sm:$0xff] %v486
    %519 = vst [vmem:[#allocation7 + $0xc8] sm:$0xff] %v487
    %520 = vst [vmem:[#allocation7 + $0xd0] sm:$0xff] %v488
    %521 = vst [vmem:[#allocation7 + $0xd8] sm:$0xff] %v489
    %522 = vst [vmem:[#allocation7 + $0xe0] sm:$0xff] %v490
    %523 = vst [vmem:[#allocation7 + $0xe8] sm:$0xff] %v491
    %524 = vst [vmem:[#allocation7 + $0xf0] sm:$0xff] %v492
    %525 = vst [vmem:[#allocation7 + $0xf8] sm:$0xff] %v493
    // Predicated region
    $region22: #{tpu_custom_call.1} parent=1 // pred_check
      _
    $region23: #{tpu_custom_call.1} parent=1 // pred_check_branch
      %527 = sbr.rel (0) target = $region25
    $region24: #{tpu_custom_call.1} parent=1 // pred_region
      %s529 = ssub.s32 4096, 4096
      %530 = vsyncadd [#allocation4], %s529
      %s531 = sshll.u32 [#allocation7], 4
      %s532 = int_to_ptr.vmem [resolvable:$true] %s531
      %537 = dma.vmem_to_hbm [thread:$0]  %s532, 4096, %s2, [#allocation4], 128, 128, 8
    $region25: #{tpu_custom_call.1} parent=1 // pred_fallthru
      _
    // Predicated region
    $region26: #{tpu_custom_call.1} parent=1 // pred_check
      _
    $region27: #{tpu_custom_call.1} parent=1 // pred_check_branch
      %539 = sbr.rel (0) target = $region29
    $region28: #{tpu_custom_call.1} parent=1 // pred_region
      %540 = dma.done [#allocation4], 4096
    $region29: #{tpu_custom_call.1} parent=1 // pred_fallthru
      _
    %541 = vsyncpa [#allocation3], 1
    %542 = vsyncpa [#allocation6], 1
    %543 = vsyncpa [#allocation4], 1

</llo_original>
